<compile_context>
chip_gen: v5e
topology: v5e:2x2
jax: 0.10.0
libtpu: 0.0.40
codegen_flags: <defaults>
</compile_context>

<pallas_src>
import jax
import jax.numpy as jnp
from jax.experimental import pallas as pl
from jax.experimental.pallas import tpu as pltpu

INPUT_SIZE = 10
IN_PAD = 16          # lane-padded input width shipped through HBM
BIAS_LANE_IN = 15    # constant-1 lane in the 16-wide input
PAD = 128            # lane width of the fused hidden state
H1, H2 = 32, 64      # hidden sizes of the two ensemble members
BIAS_LANE = 96       # constant-1 lane in the 128-wide hidden state
MAX_TB = 4096        # batch-tile cap (still < 1 MiB/step incl. double buffering)


def _cdiv(a, b):
    return (a + b - 1) // b


def _round_up(n, m):
    return _cdiv(n, m) * m


# ---------------------------------------------------------------------------
# Kernel: fused 4-layer ensemble forward for one batch tile (pure dot + ReLU).
# ---------------------------------------------------------------------------
def ensemble_kernel(x_ref, w0_ref, w_ref, out_ref):
    x = x_ref[...]                                     # (TB, 16); lane 15 == 1.0 (bias lane)

    # layer 0: fused first layers of both models; bias lane routed to hidden lane 96
    h = jnp.dot(x, w0_ref[...], preferred_element_type=jnp.float32)
    h = jnp.maximum(h, 0.0)
    # layer 1: block-diagonal second layers (+ biases via lane 96)
    h = jnp.dot(h, w_ref[0], preferred_element_type=jnp.float32)
    h = jnp.maximum(h, 0.0)
    # layer 2: identity for model1 lanes, model2's third hidden layer
    h = jnp.dot(h, w_ref[1], preferred_element_type=jnp.float32)
    h = jnp.maximum(h, 0.0)
    # layer 3: blended head (softmax ensemble weights + head biases folded into column 0)
    p = jnp.dot(h, w_ref[2], preferred_element_type=jnp.float32)

    out_ref[...] = p[:, 0:1]                           # narrow (TB, 1) writeback


# ---------------------------------------------------------------------------
# One-time parameter init & packing (hoisted out of the forward path).
# ---------------------------------------------------------------------------
def init_params(key):
    """Deterministic PyTorch-Linear-style init: U(-1/sqrt(fan_in), 1/sqrt(fan_in))."""
    def linear(key, fan_in, fan_out):
        k1, k2 = jax.random.split(key)
        bound = 1.0 / jnp.sqrt(fan_in)
        w = jax.random.uniform(k1, (fan_in, fan_out), jnp.float32, -bound, bound)
        b = jax.random.uniform(k2, (fan_out,), jnp.float32, -bound, bound)
        return w, b

    keys = jax.random.split(key, 8)
    m1 = [linear(keys[0], INPUT_SIZE, H1),
          linear(keys[1], H1, H1),
          linear(keys[2], H1, 1)]
    m2 = [linear(keys[3], INPUT_SIZE, H2),
          linear(keys[4], H2, H2),
          linear(keys[5], H2, H2),
          linear(keys[6], H2, 1)]
    model_weights = jnp.ones((2,), jnp.float32) / 2.0   # as in the module __init__
    return m1, m2, model_weights


def pack_params(m1, m2, model_weights):
    """Fuse both MLPs (+ all biases + softmax blend) into two weight slabs. Run ONCE."""
    (w11, b11), (w12, b12), (w13, b13) = m1
    (w21, b21), (w22, b22), (w23, b23), (w24, b24) = m2
    wsm = jax.nn.softmax(model_weights.astype(jnp.float32), axis=0)

    # layer 0 slab: (16, 128); input bias lane 15 carries every first-layer bias
    W0 = jnp.zeros((IN_PAD, PAD), jnp.float32)
    W0 = W0.at[:INPUT_SIZE, 0:H1].set(w11.astype(jnp.float32))
    W0 = W0.at[:INPUT_SIZE, H1:H1 + H2].set(w21.astype(jnp.float32))
    W0 = W0.at[BIAS_LANE_IN, 0:H1].set(b11.astype(jnp.float32))
    W0 = W0.at[BIAS_LANE_IN, H1:H1 + H2].set(b21.astype(jnp.float32))
    W0 = W0.at[BIAS_LANE_IN, BIAS_LANE].set(1.0)        # propagate the constant 1

    # layers 1..3 slab: (3, 128, 128)
    W = jnp.zeros((3, PAD, PAD), jnp.float32)
    # layer 1: block-diagonal second layers
    W = W.at[0, 0:H1, 0:H1].set(w12.astype(jnp.float32))
    W = W.at[0, H1:H1 + H2, H1:H1 + H2].set(w22.astype(jnp.float32))
    W = W.at[0, BIAS_LANE, 0:H1].set(b12.astype(jnp.float32))
    W = W.at[0, BIAS_LANE, H1:H1 + H2].set(b22.astype(jnp.float32))
    W = W.at[0, BIAS_LANE, BIAS_LANE].set(1.0)
    # layer 2: model1 lanes pass through; model2 third hidden layer
    W = W.at[1, 0:H1, 0:H1].set(jnp.eye(H1, dtype=jnp.float32))
    W = W.at[1, H1:H1 + H2, H1:H1 + H2].set(w23.astype(jnp.float32))
    W = W.at[1, BIAS_LANE, H1:H1 + H2].set(b23.astype(jnp.float32))
    W = W.at[1, BIAS_LANE, BIAS_LANE].set(1.0)
    # layer 3: blended head; softmax ensemble weights + head biases folded into column 0
    W = W.at[2, 0:H1, 0].set(wsm[0] * w13[:, 0].astype(jnp.float32))
    W = W.at[2, H1:H1 + H2, 0].set(wsm[1] * w24[:, 0].astype(jnp.float32))
    W = W.at[2, BIAS_LANE, 0].set(wsm[0] * b13[0] + wsm[1] * b24[0])

    return W0, W


# ---------------------------------------------------------------------------
# Forward wrapper: 16-lane input pad, batch-tiled grid (>= 2 steps for megacore).
# ---------------------------------------------------------------------------
def adaptive_predictor_forward(x, W0, W):
    B = x.shape[0]
    Bp8 = _round_up(B, 8)
    # >= 2 grid steps (shards across v7x's two TensorCores) while minimizing pad waste;
    # tile cap of 4096 rows keeps each step far under the VMEM budget on every chip.
    nsteps = max(2, _cdiv(Bp8, MAX_TB))
    TB = _round_up(_cdiv(Bp8, nsteps), 8)
    Bp = TB * nsteps

    # 16-lane input (NOT 128): lanes 0:10 = data, 10:15 = 0, lane 15 = 1.0 (bias lane).
    x_pad = jnp.zeros((Bp, IN_PAD), jnp.float32)
    x_pad = x_pad.at[:B, :INPUT_SIZE].set(x.astype(jnp.float32))
    x_pad = x_pad.at[:, BIAS_LANE_IN].set(1.0)

    out = pl.pallas_call(
        ensemble_kernel,
        out_shape=jax.ShapeDtypeStruct((Bp, 1), jnp.float32),
        grid=(nsteps,),
        in_specs=[
            pl.BlockSpec((TB, IN_PAD), lambda i: (i, 0)),          # x: tiled over batch
            pl.BlockSpec((IN_PAD, PAD), lambda i: (0, 0)),         # layer-0 weights (VMEM-resident)
            pl.BlockSpec((3, PAD, PAD), lambda i: (0, 0, 0)),      # layers 1-3 weights (VMEM-resident)
        ],
        out_specs=pl.BlockSpec((TB, 1), lambda i: (i, 0)),
        compiler_params=pltpu.CompilerParams(
            dimension_semantics=("parallel",)),
    )(x_pad, W0, W)

    return out[:B]                              # (B, 1) weighted prediction


# ---------------------------------------------------------------------------
# Pure-JAX reference (unfused) for correctness checking.
# ---------------------------------------------------------------------------
def reference_forward(x, m1, m2, model_weights):
    def mlp(x, layers):
        h = x
        for i, (w, b) in enumerate(layers):
            h = h @ w + b
            if i < len(layers) - 1:
                h = jnp.maximum(h, 0.0)
        return h
    wsm = jax.nn.softmax(model_weights, axis=0)
    return wsm[0] * mlp(x, m1) + wsm[1] * mlp(x, m2)


if __name__ == "__main__":
    key = jax.random.PRNGKey(0)
    k_param, k_x1, k_x2 = jax.random.split(key, 3)

    m1, m2, model_weights = init_params(k_param)
    W0, W = pack_params(m1, m2, model_weights)         # packing happens once, at init

    # Small-batch check (single-ish tile path).
    B = 8
    x = jax.random.normal(k_x1, (B, INPUT_SIZE), jnp.float32)
    out = jax.block_until_ready(adaptive_predictor_forward(x, W0, W))
    ref = reference_forward(x, m1, m2, model_weights)
    assert out.shape == (B, 1)
    assert jnp.allclose(out, ref, atol=1e-4, rtol=1e-4), (out, ref)

    # Multi-tile check (exercises >1 grid step + batch-pad trimming).
    B2 = 24
    x2 = jax.random.normal(k_x2, (B2, INPUT_SIZE), jnp.float32)
    out2 = jax.block_until_ready(adaptive_predictor_forward(x2, W0, W))
    ref2 = reference_forward(x2, m1, m2, model_weights)
    assert out2.shape == (B2, 1)
    assert jnp.allclose(out2, ref2, atol=1e-4, rtol=1e-4), (out2, ref2)

    print("KERNEL_OK")
</pallas_src>

<mosaic_0001>
module attributes {stable_mosaic.version = 11 : i64} {
  func.func @ensemble_kernel(%arg0: i32, %arg1: memref<8x16xf32, #tpu.memory_space<vmem>>, %arg2: memref<16x128xf32, #tpu.memory_space<vmem>>, %arg3: memref<3x128x128xf32, #tpu.memory_space<vmem>>, %arg4: memref<8x1xf32, #tpu.memory_space<vmem>>) attributes {dimension_semantics = [#tpu.dimension_semantics<parallel>], iteration_bounds = array<i64: 2>, scalar_prefetch = 0 : i64, scratch_operands = 0 : i64, tpu.core_type = #tpu.core_type<tc>, window_params = [{transform_indices = @transform_0, window_bounds = array<i64: 8, 16>}, {pipeline_mode = #tpu.pipeline_mode<synchronous>, transform_indices = @transform_1, window_bounds = array<i64: 16, 128>}, {pipeline_mode = #tpu.pipeline_mode<synchronous>, transform_indices = @transform_2, window_bounds = array<i64: 3, 128, 128>}, {transform_indices = @transform_3, window_bounds = array<i64: 8, 1>}]} {
    %c0 = arith.constant 0 : index
    %c0_0 = arith.constant 0 : index
    %0 = vector.load %arg1[%c0, %c0_0] : memref<8x16xf32, #tpu.memory_space<vmem>>, vector<8x16xf32>
    %c0_1 = arith.constant 0 : index
    %c0_2 = arith.constant 0 : index
    %1 = vector.load %arg2[%c0_1, %c0_2] : memref<16x128xf32, #tpu.memory_space<vmem>>, vector<16x128xf32>
    %cst = arith.constant dense<0.000000e+00> : vector<8x128xf32>
    %2 = tpu.matmul %0, %1, %cst {dimension_numbers = #tpu.dot_dimension_numbers<[1], [0], [0], [1], [0, 0, 1, 1], [], []>} : vector<8x16xf32>, vector<16x128xf32>, vector<8x128xf32> -> vector<8x128xf32>
    %cst_3 = arith.constant 0.000000e+00 : f32
    %3 = vector.broadcast %cst_3 : f32 to vector<8x128xf32>
    %4 = arith.maximumf %2, %3 : vector<8x128xf32>
    %c0_4 = arith.constant 0 : index
    %c0_5 = arith.constant 0 : index
    %c0_6 = arith.constant 0 : index
    %5 = vector.load %arg3[%c0_4, %c0_5, %c0_6] : memref<3x128x128xf32, #tpu.memory_space<vmem>>, vector<1x128x128xf32>
    %6 = vector.shape_cast %5 : vector<1x128x128xf32> to vector<128x128xf32>
    %cst_7 = arith.constant dense<0.000000e+00> : vector<8x128xf32>
    %7 = tpu.matmul %4, %6, %cst_7 {dimension_numbers = #tpu.dot_dimension_numbers<[1], [0], [0], [1], [0, 0, 1, 1], [], []>} : vector<8x128xf32>, vector<128x128xf32>, vector<8x128xf32> -> vector<8x128xf32>
    %cst_8 = arith.constant 0.000000e+00 : f32
    %8 = vector.broadcast %cst_8 : f32 to vector<8x128xf32>
    %9 = arith.maximumf %7, %8 : vector<8x128xf32>
    %c1 = arith.constant 1 : index
    %c0_9 = arith.constant 0 : index
    %c0_10 = arith.constant 0 : index
    %10 = vector.load %arg3[%c1, %c0_9, %c0_10] : memref<3x128x128xf32, #tpu.memory_space<vmem>>, vector<1x128x128xf32>
    %11 = vector.shape_cast %10 : vector<1x128x128xf32> to vector<128x128xf32>
    %cst_11 = arith.constant dense<0.000000e+00> : vector<8x128xf32>
    %12 = tpu.matmul %9, %11, %cst_11 {dimension_numbers = #tpu.dot_dimension_numbers<[1], [0], [0], [1], [0, 0, 1, 1], [], []>} : vector<8x128xf32>, vector<128x128xf32>, vector<8x128xf32> -> vector<8x128xf32>
    %cst_12 = arith.constant 0.000000e+00 : f32
    %13 = vector.broadcast %cst_12 : f32 to vector<8x128xf32>
    %14 = arith.maximumf %12, %13 : vector<8x128xf32>
    %c2 = arith.constant 2 : index
    %c0_13 = arith.constant 0 : index
    %c0_14 = arith.constant 0 : index
    %15 = vector.load %arg3[%c2, %c0_13, %c0_14] : memref<3x128x128xf32, #tpu.memory_space<vmem>>, vector<1x128x128xf32>
    %16 = vector.shape_cast %15 : vector<1x128x128xf32> to vector<128x128xf32>
    %cst_15 = arith.constant dense<0.000000e+00> : vector<8x128xf32>
    %17 = tpu.matmul %14, %16, %cst_15 {dimension_numbers = #tpu.dot_dimension_numbers<[1], [0], [0], [1], [0, 0, 1, 1], [], []>} : vector<8x128xf32>, vector<128x128xf32>, vector<8x128xf32> -> vector<8x128xf32>
    %18 = vector.extract_strided_slice %17 {offsets = [0, 0], sizes = [8, 1], strides = [1, 1]} : vector<8x128xf32> to vector<8x1xf32>
    %c0_16 = arith.constant 0 : index
    %c0_17 = arith.constant 0 : index
    %19 = vector.load %arg4[%c0_16, %c0_17] : memref<8x1xf32, #tpu.memory_space<vmem>>, vector<8x1xf32>
    tpu.vector_store %arg4[%c0_16, %c0_17], %18 {strides = array<i32>} : memref<8x1xf32, #tpu.memory_space<vmem>>, vector<8x1xf32>,
    return
  }
  func.func @transform_0(%arg0: i32) -> (i32, i32) {
    %c0_i32 = arith.constant 0 : i32
    %c0_i32_0 = arith.constant 0 : i32
    return %arg0, %c0_i32 : i32, i32
  }
  func.func @transform_1(%arg0: i32) -> (i32, i32) {
    %c0_i32 = arith.constant 0 : i32
    %c0_i32_0 = arith.constant 0 : i32
    %c0_i32_1 = arith.constant 0 : i32
    return %c0_i32, %c0_i32_0 : i32, i32
  }
  func.func @transform_2(%arg0: i32) -> (i32, i32, i32) {
    %c0_i32 = arith.constant 0 : i32
    %c0_i32_0 = arith.constant 0 : i32
    %c0_i32_1 = arith.constant 0 : i32
    %c0_i32_2 = arith.constant 0 : i32
    return %c0_i32, %c0_i32_0, %c0_i32_1 : i32, i32, i32
  }
  func.func @transform_3(%arg0: i32) -> (i32, i32) {
    %c0_i32 = arith.constant 0 : i32
    %c0_i32_0 = arith.constant 0 : i32
    return %arg0, %c0_i32 : i32, i32
  }
}

</mosaic_0001>

<llo_original>
// kernel: tpu_custom_call.1
$region0: #{tpu_custom_call.1}
  #allocation0 [shape = 'u32[]', space=smem, size = 0x4, offset = 0x4, fixed_abs, tag = 'smem constant byte address 0x4 - core index']
  #allocation1 [shape = 'u32[72,128]{1,0:T(1,128)}', space=vmem, size = 0x9000, scoped, tag = 'internal scratch']
  %s0 = inlined_call_operand.hbm [shape: f32[16,16], index: 0, kind: input, shape index: {}]
  %s1 = inlined_call_operand.hbm [shape: f32[16,128], index: 1, kind: input, shape index: {}]
  %s2 = inlined_call_operand.hbm [shape: f32[3,128,128], index: 2, kind: input, shape index: {}]
  %s3 = inlined_call_operand.vmem [shape: f32[16,1], index: 3, kind: output, shape index: {}]
  %s4 = sld [smem:[#allocation0]]
  $region57: #{tpu_custom_call.1} parent=0
    _
  %s6 = ssub.s32 1, %s4
  %s7 = scalar_select 0, %s6, %s4
  $region1: #{tpu_custom_call.1} parent=0
    #allocation2 [shape = 'u8[8192]{0}', space=vmem, size = 0x2000, scoped, tag = 'input window, operand 0']
    #allocation3 [shape = 's32[2]{0}', space=sflag, size = 0x8, scoped, tag = 'scoped memory for tpu_custom_call.1']
    #allocation4 [shape = 'u8[8192]{0}', space=vmem, size = 0x2000, scoped, tag = 'input window, operand 1, single buffered']
    #allocation5 [shape = 's32[1]{0}', space=sflag, size = 0x4, scoped, tag = 'scoped memory for tpu_custom_call.1']
    #allocation6 [shape = 'u8[196608]{0}', space=vmem, size = 0x30000, scoped, tag = 'input window, operand 2, single buffered']
    %8 = vsyncpa [#allocation3], 0
    %s9 = scalar_lea.sflag [#allocation3], 1
    %10 = vsyncpa %s9, 0
    %11 = vsyncpa [#allocation5], 0
    loop: start=0, step=1, limit=4
    $region2: #{tpu_custom_call.1} parent=1 // loop_pre_header
      _
    $region3: #{tpu_custom_call.1} parent=1 // loop_header
      %s13 = sphi 0, %s17
      %p14 = scmp.ge.s32.totalorder %s13, 4
      %s23 = sphi 0, %s25
      %s26 = sphi 0, %s23
      %s27 = sphi 0, %s26
      %s43 = sphi 0, %s27
      %s47 = sphi 0, %s47
      %s49 = sphi 0, %s47
      %s50 = sphi 0, %s49
      %s64 = sphi 0, %s50
      %s68 = sphi 0, %s68
      %s70 = sphi 0, %s68
      %s71 = sphi 0, %s70
      %s85 = sphi 0, %s71
      %s91 = sphi 0, %s93
      %s94 = sphi 0, %s91
      %s95 = sphi 0, %s94
      %s111 = sphi 0, %s95
    $region4: #{tpu_custom_call.1} parent=1 // loop_header_branch
      %16 = sbr.rel (%p14) target = $region8
    $region5: #{tpu_custom_call.1} parent=1 // loop_body
      %s18 = ssub.s32 %s13, 1
      %s19 = ssub.s32 %s13, 2
      %s20 = sadd.s32 %s13, 1
      %s21 = ssub.s32 %s13, %s20
      %p22 = scmp.eq.s32.totalorder %s21, 0
      %s24 = sadd.s32 %s23, 1
      %s25 = scalar_select %p22, %s23, %s24
      %p28 = pneg %p22
      %p29 = scmp.eq.s32.totalorder %s13, 1
      %p30 = por %p28, %p29
      %p31 = scmp.ne.s32.totalorder %s23, %s26
      %p32 = scmp.eq.s32.totalorder %s13, 0
      %p33 = por %p31, %p32
      %p34 = scmp.ne.s32.totalorder %s23, %s26
      %p35 = scmp.eq.s32.totalorder %s18, 1
      %p36 = por %p34, %p35
      %p37 = scmp.ne.s32.totalorder %s26, %s27
      %p38 = scmp.eq.s32.totalorder %s18, 0
      %p39 = por %p37, %p38
      %p40 = scmp.ne.s32.totalorder %s26, %s27
      %p41 = scmp.eq.s32.totalorder %s19, 1
      %p42 = por %p40, %p41
      %p44 = scmp.ne.s32.totalorder %s27, %s43
      %p45 = scmp.eq.s32.totalorder %s19, 0
      %p46 = por %p44, %p45
      %s48 = sadd.s32 %s47, 1
      %p51 = scmp.eq.s32.totalorder %s13, 1
      %p52 = scmp.ne.s32.totalorder %s47, %s49
      %p53 = scmp.eq.s32.totalorder %s13, 0
      %p54 = por %p52, %p53
      %p55 = scmp.ne.s32.totalorder %s47, %s49
      %p56 = scmp.eq.s32.totalorder %s18, 1
      %p57 = por %p55, %p56
      %p58 = scmp.ne.s32.totalorder %s49, %s50
      %p59 = scmp.eq.s32.totalorder %s18, 0
      %p60 = por %p58, %p59
      %p61 = scmp.ne.s32.totalorder %s49, %s50
      %p62 = scmp.eq.s32.totalorder %s19, 1
      %p63 = por %p61, %p62
      %p65 = scmp.ne.s32.totalorder %s50, %s64
      %p66 = scmp.eq.s32.totalorder %s19, 0
      %p67 = por %p65, %p66
      %s69 = sadd.s32 %s68, 1
      %p72 = scmp.eq.s32.totalorder %s13, 1
      %p73 = scmp.ne.s32.totalorder %s68, %s70
      %p74 = scmp.eq.s32.totalorder %s13, 0
      %p75 = por %p73, %p74
      %p76 = scmp.ne.s32.totalorder %s68, %s70
      %p77 = scmp.eq.s32.totalorder %s18, 1
      %p78 = por %p76, %p77
      %p79 = scmp.ne.s32.totalorder %s70, %s71
      %p80 = scmp.eq.s32.totalorder %s18, 0
      %p81 = por %p79, %p80
      %p82 = scmp.ne.s32.totalorder %s70, %s71
      %p83 = scmp.eq.s32.totalorder %s19, 1
      %p84 = por %p82, %p83
      %p86 = scmp.ne.s32.totalorder %s71, %s85
      %p87 = scmp.eq.s32.totalorder %s19, 0
      %p88 = por %p86, %p87
      %s89 = ssub.s32 %s13, %s20
      %p90 = scmp.eq.s32.totalorder %s89, 0
      %s92 = sadd.s32 %s91, 1
      %s93 = scalar_select %p90, %s91, %s92
      %p96 = pneg %p90
      %p97 = scmp.eq.s32.totalorder %s13, 1
      %p98 = por %p96, %p97
      %p99 = scmp.ne.s32.totalorder %s91, %s94
      %p100 = scmp.eq.s32.totalorder %s13, 0
      %p101 = por %p99, %p100
      %p102 = scmp.ne.s32.totalorder %s91, %s94
      %p103 = scmp.eq.s32.totalorder %s18, 1
      %p104 = por %p102, %p103
      %p105 = scmp.ne.s32.totalorder %s94, %s95
      %p106 = scmp.eq.s32.totalorder %s18, 0
      %p107 = por %p105, %p106
      %p108 = scmp.ne.s32.totalorder %s94, %s95
      %p109 = scmp.eq.s32.totalorder %s19, 1
      %p110 = por %p108, %p109
      %p112 = scmp.ne.s32.totalorder %s95, %s111
      %p113 = scmp.eq.s32.totalorder %s19, 0
      %p114 = por %p112, %p113
      %p115 = scmp.le.s32.totalorder 1, %s13
      %p116 = scmp.lt.s32.totalorder %s13, 3
      %p117 = pnand %p115, %p116
      %p118 = pneg %p117
      // Predicated region
      $region9: #{tpu_custom_call.1} parent=5 // pred_check
        _
      $region10: #{tpu_custom_call.1} parent=5 // pred_check_branch
        %120 = sbr.rel (%p117) target = $region12
      $region11: #{tpu_custom_call.1} parent=5 // pred_region
        %s121 = ssub.s32 %s13, 1
        // Predicated region
        $region13: #{tpu_custom_call.1} parent=11 // pred_check
          %p122 = pneg %p60
        $region14: #{tpu_custom_call.1} parent=11 // pred_check_branch
          %124 = sbr.rel (%p122) target = $region16
        $region15: #{tpu_custom_call.1} parent=11 // pred_region
          %126 = vsyncadd [#allocation5], 0
          %s127 = sshll.u32 %s1, 4
          %s128 = int_to_ptr.hbm [resolvable:$true] %s127
          %s129 = sshll.u32 [#allocation4], 4
          %s130 = int_to_ptr.vmem [resolvable:$true] %s129
          %135 = dma.hbm_to_vmem [thread:$0]  %s128, 256, %s130, [#allocation5], 128, 128, 8
        $region16: #{tpu_custom_call.1} parent=11 // pred_fallthru
          _
        // Predicated region
        $region17: #{tpu_custom_call.1} parent=11 // pred_check
          %p136 = pneg %p81
        $region18: #{tpu_custom_call.1} parent=11 // pred_check_branch
          %138 = sbr.rel (%p136) target = $region20
        $region19: #{tpu_custom_call.1} parent=11 // pred_region
          %140 = vsyncadd [#allocation5], 0
          %s141 = sshll.u32 %s2, 4
          %s142 = int_to_ptr.hbm [resolvable:$true] %s141
          %s143 = sshll.u32 [#allocation6], 4
          %s144 = int_to_ptr.vmem [resolvable:$true] %s143
          %149 = dma.hbm_to_vmem [thread:$0]  %s142, 6144, %s144, [#allocation5], 128, 128, 8
        $region20: #{tpu_custom_call.1} parent=11 // pred_fallthru
          _
      $region12: #{tpu_custom_call.1} parent=5 // pred_fallthru
        _
      %p150 = scmp.lt.s32.totalorder %s13, 2
      // Predicated region
      $region21: #{tpu_custom_call.1} parent=5 // pred_check
        %p151 = pneg %p150
      $region22: #{tpu_custom_call.1} parent=5 // pred_check_branch
        %153 = sbr.rel (%p151) target = $region24
      $region23: #{tpu_custom_call.1} parent=5 // pred_region
        // Predicated region
        $region25: #{tpu_custom_call.1} parent=23 // pred_check
          %p154 = pneg %p33
        $region26: #{tpu_custom_call.1} parent=23 // pred_check_branch
          %156 = sbr.rel (%p154) target = $region28
        $region27: #{tpu_custom_call.1} parent=23 // pred_region
          %s157 = sand.u32 %s23, 1
          %s158 = scalar_lea.sflag [#allocation3], %s157
          %s159 = sand.u32 %s23, 1
          %s160 = smul.addr %s159, 8
          %s161 = scalar_lea.vmem [#allocation2], %s160
          %163 = vsyncadd %s158, 0
          %s164 = smul.addr %s13, 8
          %s165 = scalar_lea.hbm %s0, %s164
          %s167 = sshll.u32 %s165, 4
          %s168 = int_to_ptr.hbm [resolvable:$true] %s167
          %s169 = sshll.u32 %s161, 4
          %s170 = int_to_ptr.vmem [resolvable:$true] %s169
          %172 = dma.hbm_to_vmem [thread:$0]  %s168, 128, %s170, %s158
        $region28: #{tpu_custom_call.1} parent=23 // pred_fallthru
          _
      $region24: #{tpu_custom_call.1} parent=5 // pred_fallthru
        _
      %p173 = scmp.le.s32.totalorder 1, %s13
      %p174 = scmp.lt.s32.totalorder %s13, 3
      %p175 = pnand %p173, %p174
      %p176 = pneg %p175
      // Predicated region
      $region29: #{tpu_custom_call.1} parent=5 // pred_check
        _
      $region30: #{tpu_custom_call.1} parent=5 // pred_check_branch
        %178 = sbr.rel (%p175) target = $region32
      $region31: #{tpu_custom_call.1} parent=5 // pred_region
        %s179 = ssub.s32 %s13, 1
        %s180 = sand.u32 %s26, 1
        %s181 = scalar_lea.sflag [#allocation3], %s180
        %s182 = sand.u32 %s26, 1
        %s183 = smul.addr %s182, 8
        %s184 = scalar_lea.vmem [#allocation2], %s183
        // Predicated region
        $region33: #{tpu_custom_call.1} parent=31 // pred_check
          %p185 = pneg %p39
        $region34: #{tpu_custom_call.1} parent=31 // pred_check_branch
          %187 = sbr.rel (%p185) target = $region36
        $region35: #{tpu_custom_call.1} parent=31 // pred_region
          %189 = dma.done %s181, 128
        $region36: #{tpu_custom_call.1} parent=31 // pred_fallthru
          _
        // Predicated region
        $region37: #{tpu_custom_call.1} parent=31 // pred_check
          %p190 = pneg %p60
        $region38: #{tpu_custom_call.1} parent=31 // pred_check_branch
          %192 = sbr.rel (%p190) target = $region40
        $region39: #{tpu_custom_call.1} parent=31 // pred_region
          %194 = dma.done [#allocation5], 256
        $region40: #{tpu_custom_call.1} parent=31 // pred_fallthru
          _
        // Predicated region
        $region41: #{tpu_custom_call.1} parent=31 // pred_check
          %p195 = pneg %p81
        $region42: #{tpu_custom_call.1} parent=31 // pred_check_branch
          %197 = sbr.rel (%p195) target = $region44
        $region43: #{tpu_custom_call.1} parent=31 // pred_region
          %199 = dma.done [#allocation5], 6144
        $region44: #{tpu_custom_call.1} parent=31 // pred_fallthru
          _
        %s200 = sand.u32 %s26, 1
        %s201 = scalar_lea.sflag [#allocation3], %s200
        %s202 = sand.u32 %s26, 1
        %s203 = smul.addr %s202, 8
        %s204 = scalar_lea.vmem [#allocation2], %s203
        %p205 = pneg %p39
        %p206 = pneg %p36
        %p207 = pneg %p60
        %p208 = pneg %p57
        %p209 = pneg %p81
        %p210 = pneg %p78
        %p211 = pneg %p107
        %p212 = pneg %p104
        %p213 = scmp.lt.s32.totalorder %s18, 1
        %s214 = scalar_select %p213, %s18, 1
        %s215 = smul.addr %s214, 8
        %s216 = scalar_lea.vmem %s3, %s215
        %p217 = scmp.lt.s32.totalorder %s18, 1
        %s218 = scalar_select %p217, %s18, 1
        %s219 = smul.addr %s218, 8
        %s220 = scalar_lea.vmem %s3, %s219
        %v221 = vld [vmem:[%s184] sm:$0xff]
        %v222 = vld [vmem:[#allocation4] sm:$0xff]
        %v223 = vld [vmem:[#allocation4 + $0x8] sm:$0xff]
        %vm224 = vcmask 130048
        %v226 = vsel %vm224, %v221, 0
        %228 = vmatpush.msra.mxu0 0.0
        %229 = vmatpush.msra.mxu0 0.0
        %230 = vmatpush.msra.mxu0 0.0
        %231 = vmatpush.msra.mxu0 0.0
        %232 = vmatpush.msra.mxu0 0.0
        %233 = vmatpush.msra.mxu0 0.0
        %234 = vmatpush.msra.mxu0 0.0
        %235 = vmatpush.msra.mxu0 0.0
        %236 = vmatpush.msra.mxu0 0.0
        %237 = vmatpush.msra.mxu0 0.0
        %238 = vmatpush.msra.mxu0 0.0
        %239 = vmatpush.msra.mxu0 0.0
        %240 = vmatpush.msra.mxu0 0.0
        %241 = vmatpush.msra.mxu0 0.0
        %242 = vmatpush.msra.mxu0 %v223
        %243 = vmatpush.msra.mxu0 %v222
        %244 = vmatmul.f32.gmra.mxu0 %v226
        %v245 = vpop.f32.mrf.mxu0
        %v246 = vadd.f32 0.0, %v245
        %247 = vdwg.mxu0
        %v248 = vmax.f32 %v246, 0.0
        %v249 = vld [vmem:[#allocation6] sm:$0xff]
        %v250 = vld [vmem:[#allocation6 + $0x8] sm:$0xff]
        %v251 = vld [vmem:[#allocation6 + $0x10] sm:$0xff]
        %v252 = vld [vmem:[#allocation6 + $0x18] sm:$0xff]
        %v253 = vld [vmem:[#allocation6 + $0x20] sm:$0xff]
        %v254 = vld [vmem:[#allocation6 + $0x28] sm:$0xff]
        %v255 = vld [vmem:[#allocation6 + $0x30] sm:$0xff]
        %v256 = vld [vmem:[#allocation6 + $0x38] sm:$0xff]
        %v257 = vld [vmem:[#allocation6 + $0x40] sm:$0xff]
        %v258 = vld [vmem:[#allocation6 + $0x48] sm:$0xff]
        %v259 = vld [vmem:[#allocation6 + $0x50] sm:$0xff]
        %v260 = vld [vmem:[#allocation6 + $0x58] sm:$0xff]
        %v261 = vld [vmem:[#allocation6 + $0x60] sm:$0xff]
        %v262 = vld [vmem:[#allocation6 + $0x68] sm:$0xff]
        %v263 = vld [vmem:[#allocation6 + $0x70] sm:$0xff]
        %v264 = vld [vmem:[#allocation6 + $0x78] sm:$0xff]
        %265 = vmatpush.msra.mxu0 %v264
        %266 = vmatpush.msra.mxu0 %v263
        %267 = vmatpush.msra.mxu0 %v262
        %268 = vmatpush.msra.mxu0 %v261
        %269 = vmatpush.msra.mxu0 %v260
        %270 = vmatpush.msra.mxu0 %v259
        %271 = vmatpush.msra.mxu0 %v258
        %272 = vmatpush.msra.mxu0 %v257
        %273 = vmatpush.msra.mxu0 %v256
        %274 = vmatpush.msra.mxu0 %v255
        %275 = vmatpush.msra.mxu0 %v254
        %276 = vmatpush.msra.mxu0 %v253
        %277 = vmatpush.msra.mxu0 %v252
        %278 = vmatpush.msra.mxu0 %v251
        %279 = vmatpush.msra.mxu0 %v250
        %280 = vmatpush.msra.mxu0 %v249
        %281 = vmatmul.f32.gmra.mxu0 %v248
        %v282 = vpop.f32.mrf.mxu0
        %v283 = vadd.f32 0.0, %v282
        %284 = vdwg.mxu0
        %v285 = vmax.f32 %v283, 0.0
        %s286 = scalar_lea.vmem [#allocation6], 128
        %v287 = vld [vmem:[%s286] sm:$0xff]
        %v288 = vld [vmem:[%s286 + $0x8] sm:$0xff]
        %v289 = vld [vmem:[%s286 + $0x10] sm:$0xff]
        %v290 = vld [vmem:[%s286 + $0x18] sm:$0xff]
        %v291 = vld [vmem:[%s286 + $0x20] sm:$0xff]
        %v292 = vld [vmem:[%s286 + $0x28] sm:$0xff]
        %v293 = vld [vmem:[%s286 + $0x30] sm:$0xff]
        %v294 = vld [vmem:[%s286 + $0x38] sm:$0xff]
        %v295 = vld [vmem:[%s286 + $0x40] sm:$0xff]
        %v296 = vld [vmem:[%s286 + $0x48] sm:$0xff]
        %v297 = vld [vmem:[%s286 + $0x50] sm:$0xff]
        %v298 = vld [vmem:[%s286 + $0x58] sm:$0xff]
        %v299 = vld [vmem:[%s286 + $0x60] sm:$0xff]
        %v300 = vld [vmem:[%s286 + $0x68] sm:$0xff]
        %v301 = vld [vmem:[%s286 + $0x70] sm:$0xff]
        %v302 = vld [vmem:[%s286 + $0x78] sm:$0xff]
        %303 = vmatpush.msra.mxu0 %v302
        %304 = vmatpush.msra.mxu0 %v301
        %305 = vmatpush.msra.mxu0 %v300
        %306 = vmatpush.msra.mxu0 %v299
        %307 = vmatpush.msra.mxu0 %v298
        %308 = vmatpush.msra.mxu0 %v297
        %309 = vmatpush.msra.mxu0 %v296
        %310 = vmatpush.msra.mxu0 %v295
        %311 = vmatpush.msra.mxu0 %v294
        %312 = vmatpush.msra.mxu0 %v293
        %313 = vmatpush.msra.mxu0 %v292
        %314 = vmatpush.msra.mxu0 %v291
        %315 = vmatpush.msra.mxu0 %v290
        %316 = vmatpush.msra.mxu0 %v289
        %317 = vmatpush.msra.mxu0 %v288
        %318 = vmatpush.msra.mxu0 %v287
        %319 = vmatmul.f32.gmra.mxu0 %v285
        %v320 = vpop.f32.mrf.mxu0
        %v321 = vadd.f32 0.0, %v320
        %322 = vdwg.mxu0
        %v323 = vmax.f32 %v321, 0.0
        %s324 = scalar_lea.vmem [#allocation6], 256
        %v325 = vld [vmem:[%s324] sm:$0xff]
        %v326 = vld [vmem:[%s324 + $0x8] sm:$0xff]
        %v327 = vld [vmem:[%s324 + $0x10] sm:$0xff]
        %v328 = vld [vmem:[%s324 + $0x18] sm:$0xff]
        %v329 = vld [vmem:[%s324 + $0x20] sm:$0xff]
        %v330 = vld [vmem:[%s324 + $0x28] sm:$0xff]
        %v331 = vld [vmem:[%s324 + $0x30] sm:$0xff]
        %v332 = vld [vmem:[%s324 + $0x38] sm:$0xff]
        %v333 = vld [vmem:[%s324 + $0x40] sm:$0xff]
        %v334 = vld [vmem:[%s324 + $0x48] sm:$0xff]
        %v335 = vld [vmem:[%s324 + $0x50] sm:$0xff]
        %v336 = vld [vmem:[%s324 + $0x58] sm:$0xff]
        %v337 = vld [vmem:[%s324 + $0x60] sm:$0xff]
        %v338 = vld [vmem:[%s324 + $0x68] sm:$0xff]
        %v339 = vld [vmem:[%s324 + $0x70] sm:$0xff]
        %v340 = vld [vmem:[%s324 + $0x78] sm:$0xff]
        %341 = vmatpush.msra.mxu0 %v340
        %342 = vmatpush.msra.mxu0 %v339
        %343 = vmatpush.msra.mxu0 %v338
        %344 = vmatpush.msra.mxu0 %v337
        %345 = vmatpush.msra.mxu0 %v336
        %346 = vmatpush.msra.mxu0 %v335
        %347 = vmatpush.msra.mxu0 %v334
        %348 = vmatpush.msra.mxu0 %v333
        %349 = vmatpush.msra.mxu0 %v332
        %350 = vmatpush.msra.mxu0 %v331
        %351 = vmatpush.msra.mxu0 %v330
        %352 = vmatpush.msra.mxu0 %v329
        %353 = vmatpush.msra.mxu0 %v328
        %354 = vmatpush.msra.mxu0 %v327
        %355 = vmatpush.msra.mxu0 %v326
        %356 = vmatpush.msra.mxu0 %v325
        %357 = vmatmul.f32.gmra.mxu0 %v323
        %v358 = vpop.f32.mrf.mxu0
        %v359 = vadd.f32 0.0, %v358
        %360 = vdwg.mxu0
        %vm361 = vcmask 7168
        %362 = vst.msk [vmem:[%s220] sm:$0xff] %vm361, %v359
        %p363 = scmp.lt.s32.totalorder %s18, 1
        %s364 = scalar_select %p363, %s18, 1
        %s365 = smul.addr %s364, 8
        %s366 = scalar_lea.vmem %s3, %s365
        // Predicated region
        $region45: #{tpu_custom_call.1} parent=31 // pred_check
          %p367 = pneg %p104
        $region46: #{tpu_custom_call.1} parent=31 // pred_check_branch
          %369 = sbr.rel (%p367) target = $region48
        $region47: #{tpu_custom_call.1} parent=31 // pred_region
          _
        $region48: #{tpu_custom_call.1} parent=31 // pred_fallthru
          _
      $region32: #{tpu_custom_call.1} parent=5 // pred_fallthru
        _
      %p370 = scmp.le.s32.totalorder 2, %s13
      // Predicated region
      $region49: #{tpu_custom_call.1} parent=5 // pred_check
        %p371 = pneg %p370
      $region50: #{tpu_custom_call.1} parent=5 // pred_check_branch
        %373 = sbr.rel (%p371) target = $region52
      $region51: #{tpu_custom_call.1} parent=5 // pred_region
        %s374 = ssub.s32 %s13, 2
        // Predicated region
        $region53: #{tpu_custom_call.1} parent=51 // pred_check
          %p375 = pneg %p110
        $region54: #{tpu_custom_call.1} parent=51 // pred_check_branch
          %377 = sbr.rel (%p375) target = $region56
        $region55: #{tpu_custom_call.1} parent=51 // pred_region
          %p378 = scmp.lt.s32.totalorder %s19, 1
          %s379 = scalar_select %p378, %s19, 1
          %s380 = smul.addr %s379, 8
          %s381 = scalar_lea.vmem %s3, %s380
        $region56: #{tpu_custom_call.1} parent=51 // pred_fallthru
          _
      $region52: #{tpu_custom_call.1} parent=5 // pred_fallthru
        _
    $region6: #{tpu_custom_call.1} parent=1 // loop_footer
      %s17 = sadd.s32 1, %s13
    $region7: #{tpu_custom_call.1} parent=1 // loop_footer_branch
      %12 = sbr.rel target = $region3
    $region8: #{tpu_custom_call.1} parent=1 // loop_exit
      _
    %382 = vsyncpa [#allocation3], 1
    %s383 = scalar_lea.sflag [#allocation3], 1
    %384 = vsyncpa %s383, 1
    %385 = vsyncpa [#allocation5], 1

</llo_original>
